<compile_context>
chip_gen: v7x
topology: tpu7x:2x2x1
jax: 0.10.0
libtpu: 0.0.40
codegen_flags: <defaults>
</compile_context>

<pallas_src>
import jax
import jax.numpy as jnp
from jax.experimental import pallas as pl
from jax.experimental.pallas import tpu as pltpu


def _round_up(v, m):
    return ((v + m - 1) // m) * m


def _linear_sigmoid_kernel(x_ref, w_ref, b_ref, o_ref, acc_ref):
    # x_ref: (TM, TK) bf16, w_ref: (TK, TN) bf16, b_ref: (1, TN) f32,
    # o_ref: (TM, TN) out dtype, acc_ref: (TM, TN) f32 scratch.
    k = pl.program_id(2)

    @pl.when(k == 0)
    def _():
        acc_ref[...] = jnp.zeros_like(acc_ref)

    # K-loop body is pure MXU accumulate (bf16 operands, f32 accumulation).
    acc_ref[...] += jnp.dot(
        x_ref[...], w_ref[...], preferred_element_type=jnp.float32
    )

    @pl.when(k == pl.num_programs(2) - 1)
    def _():
        # Epilogue off the inner loop: bias add + sigmoid in f32, then cast.
        y = acc_ref[...] + b_ref[...]
        o_ref[...] = jax.nn.sigmoid(y).astype(o_ref.dtype)


def linear_sigmoid(x, w_t, b, *, tm=128, tn=128, tk=256, out_dtype=jnp.float32):
    """x: (B, IN), w_t: (IN, OUT) (already transposed vs nn.Linear), b: (OUT,).

    Returns sigmoid(x @ w_t + b) with shape (B, OUT), dtype out_dtype.
    """
    B, IN = x.shape
    IN2, OUT = w_t.shape
    assert IN == IN2, "weight inner dim must match x"

    # Tile sizes: MXU-friendly 128 multiples; shrink TK if K itself is small.
    tm = max(128, tm - tm % 128) if tm >= 128 else 128
    tn = max(128, tn - tn % 128) if tn >= 128 else 128
    tk = max(128, min(tk, _round_up(IN, 128)))

    Bp = _round_up(B, tm)
    INp = _round_up(IN, tk)
    OUTp = _round_up(OUT, tn)

    # bf16 operands (zero padding contributes nothing to the matmul); f32 bias.
    xb = jnp.pad(x.astype(jnp.bfloat16), ((0, Bp - B), (0, INp - IN)))
    wb = jnp.pad(w_t.astype(jnp.bfloat16), ((0, INp - IN), (0, OUTp - OUT)))
    bb = jnp.pad(b.astype(jnp.float32).reshape(1, OUT), ((0, 0), (0, OUTp - OUT)))

    grid = (Bp // tm, OUTp // tn, INp // tk)

    out = pl.pallas_call(
        _linear_sigmoid_kernel,
        out_shape=jax.ShapeDtypeStruct((Bp, OUTp), out_dtype),
        grid_spec=pltpu.PrefetchScalarGridSpec(
            num_scalar_prefetch=0,
            grid=grid,
            in_specs=[
                pl.BlockSpec((tm, tk), lambda i, j, k: (i, k)),   # x tile
                pl.BlockSpec((tk, tn), lambda i, j, k: (k, j)),   # w tile
                pl.BlockSpec((1, tn), lambda i, j, k: (0, j)),    # bias: resident over K
            ],
            out_specs=pl.BlockSpec((tm, tn), lambda i, j, k: (i, j)),
            scratch_shapes=[pltpu.VMEM((tm, tn), jnp.float32)],
        ),
        compiler_params=pltpu.CompilerParams(
            dimension_semantics=("parallel", "parallel", "arbitrary"),
            vmem_limit_bytes=64 * 1024 * 1024,
        ),
    )(xb, wb, bb)

    return out[:B, :OUT]


if __name__ == "__main__":
    # Small shapes consistent with nn.Linear: batch=8, in_features=32, out_features=32.
    B, IN, OUT = 8, 32, 32

    key = jax.random.PRNGKey(0)
    kx, kw, kb = jax.random.split(key, 3)

    x = jax.random.normal(kx, (B, IN), dtype=jnp.float32)
    # Deterministic parameter init (Kaiming-uniform-like range, as nn.Linear would use).
    bound = 1.0 / (IN ** 0.5)
    w = jax.random.uniform(kw, (OUT, IN), minval=-bound, maxval=bound, dtype=jnp.float32)
    b = jax.random.uniform(kb, (OUT,), minval=-bound, maxval=bound, dtype=jnp.float32)

    # Pre-transpose weight to [IN, OUT] (glue in plain JAX, outside the kernel).
    w_t = jnp.transpose(w)

    out = linear_sigmoid(x, w_t, b)
    out = jax.block_until_ready(out)
    assert out.shape == (B, OUT)

    # Reference at the same operand precision as the kernel's MXU path
    # (bf16 inputs, f32 accumulate, f32 epilogue).
    xr = x.astype(jnp.bfloat16).astype(jnp.float32)
    wr = w_t.astype(jnp.bfloat16).astype(jnp.float32)
    ref = jax.nn.sigmoid(xr @ wr + b.reshape(1, OUT))
    assert jnp.allclose(out, ref, atol=2e-3, rtol=2e-3)

    # Looser sanity check against the pure-f32 reference.
    ref_f32 = jax.nn.sigmoid(x @ w_t + b.reshape(1, OUT))
    assert jnp.allclose(out, ref_f32, atol=3e-2, rtol=3e-2)

    print("KERNEL_OK")
</pallas_src>

<mosaic_0001>
module attributes {stable_mosaic.version = 11 : i64} {
  func.func @_linear_sigmoid_kernel(%arg0: i32, %arg1: i32, %arg2: i32, %arg3: memref<128x128xbf16, #tpu.memory_space<vmem>>, %arg4: memref<128x128xbf16, #tpu.memory_space<vmem>>, %arg5: memref<1x128xf32, #tpu.memory_space<vmem>>, %arg6: memref<128x128xf32, #tpu.memory_space<vmem>>, %arg7: memref<128x128xf32, #tpu.memory_space<vmem>>) attributes {dimension_semantics = [#tpu.dimension_semantics<parallel>, #tpu.dimension_semantics<parallel>, #tpu.dimension_semantics<arbitrary>], iteration_bounds = array<i64: 1, 1, 1>, scalar_prefetch = 0 : i64, scratch_operands = 1 : i64, tpu.core_type = #tpu.core_type<tc>, window_params = [{transform_indices = @transform_0, window_bounds = array<i64: 128, 128>}, {transform_indices = @transform_1, window_bounds = array<i64: 128, 128>}, {transform_indices = @transform_2, window_bounds = array<i64: 1, 128>}, {transform_indices = @transform_3, window_bounds = array<i64: 128, 128>}]} {
    %c0_i32 = arith.constant 0 : i32
    %0 = arith.cmpi eq, %arg2, %c0_i32 : i32
    %1 = arith.extui %0 : i1 to i32
    %c0_i32_0 = arith.constant 0 : i32
    %2 = arith.cmpi ne, %1, %c0_i32_0 : i32
    scf.if %2 {
      %cst_10 = arith.constant 0.000000e+00 : f32
      %12 = vector.broadcast %cst_10 : f32 to vector<128x128xf32>
      %c0_11 = arith.constant 0 : index
      %c0_12 = arith.constant 0 : index
      %13 = vector.load %arg7[%c0_11, %c0_12] : memref<128x128xf32, #tpu.memory_space<vmem>>, vector<128x128xf32>
      tpu.vector_store %arg7[%c0_11, %c0_12], %12 {strides = array<i32>} : memref<128x128xf32, #tpu.memory_space<vmem>>, vector<128x128xf32>,
    } else {
    }
    %c0 = arith.constant 0 : index
    %c0_1 = arith.constant 0 : index
    %3 = vector.load %arg7[%c0, %c0_1] : memref<128x128xf32, #tpu.memory_space<vmem>>, vector<128x128xf32>
    %c0_2 = arith.constant 0 : index
    %c0_3 = arith.constant 0 : index
    %4 = vector.load %arg3[%c0_2, %c0_3] : memref<128x128xbf16, #tpu.memory_space<vmem>>, vector<128x128xbf16>
    %c0_4 = arith.constant 0 : index
    %c0_5 = arith.constant 0 : index
    %5 = vector.load %arg4[%c0_4, %c0_5] : memref<128x128xbf16, #tpu.memory_space<vmem>>, vector<128x128xbf16>
    %cst = arith.constant dense<0.000000e+00> : vector<128x128xf32>
    %6 = tpu.matmul %4, %5, %cst {dimension_numbers = #tpu.dot_dimension_numbers<[1], [0], [0], [1], [0, 0, 1, 1], [], []>} : vector<128x128xbf16>, vector<128x128xbf16>, vector<128x128xf32> -> vector<128x128xf32>
    %7 = arith.addf %3, %6 : vector<128x128xf32>
    %c0_6 = arith.constant 0 : index
    %c0_7 = arith.constant 0 : index
    %8 = vector.load %arg7[%c0_6, %c0_7] : memref<128x128xf32, #tpu.memory_space<vmem>>, vector<128x128xf32>
    tpu.vector_store %arg7[%c0_6, %c0_7], %7 {strides = array<i32>} : memref<128x128xf32, #tpu.memory_space<vmem>>, vector<128x128xf32>,
    %c0_i32_8 = arith.constant 0 : i32
    %9 = arith.cmpi eq, %arg2, %c0_i32_8 : i32
    %10 = arith.extui %9 : i1 to i32
    %c0_i32_9 = arith.constant 0 : i32
    %11 = arith.cmpi ne, %10, %c0_i32_9 : i32
    scf.if %11 {
      %c0_10 = arith.constant 0 : index
      %c0_11 = arith.constant 0 : index
      %12 = vector.load %arg7[%c0_10, %c0_11] : memref<128x128xf32, #tpu.memory_space<vmem>>, vector<128x128xf32>
      %c0_12 = arith.constant 0 : index
      %c0_13 = arith.constant 0 : index
      %13 = vector.load %arg5[%c0_12, %c0_13] : memref<1x128xf32, #tpu.memory_space<vmem>>, vector<1x128xf32>
      %14 = vector.broadcast %13 : vector<1x128xf32> to vector<128x128xf32>
      %15 = arith.addf %12, %14 : vector<128x128xf32>
      %16 = arith.negf %15 : vector<128x128xf32>
      %17 = math.exp %16 : vector<128x128xf32>
      %cst_14 = arith.constant 1.000000e+00 : f32
      %18 = vector.broadcast %cst_14 : f32 to vector<128x128xf32>
      %19 = arith.addf %18, %17 : vector<128x128xf32>
      %20 = arith.divf %18, %19 : vector<128x128xf32>
      %c0_15 = arith.constant 0 : index
      %c0_16 = arith.constant 0 : index
      %21 = vector.load %arg6[%c0_15, %c0_16] : memref<128x128xf32, #tpu.memory_space<vmem>>, vector<128x128xf32>
      tpu.vector_store %arg6[%c0_15, %c0_16], %20 {strides = array<i32>} : memref<128x128xf32, #tpu.memory_space<vmem>>, vector<128x128xf32>,
    } else {
    }
    return
  }
  func.func @transform_0(%arg0: i32, %arg1: i32, %arg2: i32) -> (i32, i32) {
    %c0_i32 = arith.constant 0 : i32
    return %arg0, %arg2 : i32, i32
  }
  func.func @transform_1(%arg0: i32, %arg1: i32, %arg2: i32) -> (i32, i32) {
    %c0_i32 = arith.constant 0 : i32
    return %arg2, %arg1 : i32, i32
  }
  func.func @transform_2(%arg0: i32, %arg1: i32, %arg2: i32) -> (i32, i32) {
    %c0_i32 = arith.constant 0 : i32
    %c0_i32_0 = arith.constant 0 : i32
    return %c0_i32, %arg1 : i32, i32
  }
  func.func @transform_3(%arg0: i32, %arg1: i32, %arg2: i32) -> (i32, i32) {
    %c0_i32 = arith.constant 0 : i32
    return %arg0, %arg1 : i32, i32
  }
}

</mosaic_0001>

<llo_original>
// kernel: tpu_custom_call.1
$region0: #{tpu_custom_call.1}
  #allocation0 [shape = 'u32[]', space=smem, size = 0x4, offset = 0x4, fixed_abs, tag = 'smem constant byte address 0x4 - core index']
  #allocation1 [shape = 'u32[144,128]{1,0:T(1,128)}', space=vmem, size = 0x12000, scoped, tag = 'internal scratch']
  #allocation2 [shape = 'f32[128,128]{1,0:T(8,128)}', space=vmem, size = 0x10000, scoped, tag = 'scratch operand']
  %s0 = inlined_call_operand.hbm [shape: bf16[128,128], index: 0, kind: input, shape index: {}]
  %s1 = inlined_call_operand.hbm [shape: bf16[128,128], index: 1, kind: input, shape index: {}]
  %s2 = inlined_call_operand.hbm [shape: f32[1,128], index: 2, kind: input, shape index: {}]
  %s3 = inlined_call_operand.hbm [shape: f32[128,128], index: 3, kind: output, shape index: {}]
  %s4 = sld [smem:[#allocation0]]
  $region42: #{tpu_custom_call.1} parent=0
    _
  %s6 = ssub.s32 1, %s4
  %s7 = scalar_select 0, %s6, %s4
  $region1: #{tpu_custom_call.1} parent=0
    #allocation3 [shape = 'u8[32768]{0}', space=vmem, size = 0x8000, scoped, tag = 'input window, operand 0, single buffered']
    #allocation4 [shape = 's32[1]{0}', space=sflag, size = 0x4, scoped, tag = 'scoped memory for tpu_custom_call.1']
    #allocation5 [shape = 's32[1]{0}', space=sflag, size = 0x4, scoped, tag = 'scoped memory for tpu_custom_call.1']
    #allocation6 [shape = 'u8[32768]{0}', space=vmem, size = 0x8000, scoped, tag = 'input window, operand 1, single buffered']
    #allocation7 [shape = 's32[1]{0}', space=sflag, size = 0x4, scoped, tag = 'scoped memory for tpu_custom_call.1']
    #allocation8 [shape = 'u8[512]{0}', space=vmem, size = 0x400, scoped, tag = 'input window, operand 2, single buffered']
    #allocation9 [shape = 'u8[65536]{0}', space=vmem, size = 0x10000, scoped, tag = 'output window, operand 0, single buffered']
    %8 = vsyncpa [#allocation4], 0
    %9 = vsyncpa [#allocation7], 0
    %10 = vsyncpa [#allocation5], 0
    // Predicated region
    $region2: #{tpu_custom_call.1} parent=1 // pred_check
      _
    $region3: #{tpu_custom_call.1} parent=1 // pred_check_branch
      %12 = sbr.rel (0) target = $region5
    $region4: #{tpu_custom_call.1} parent=1 // pred_region
      %s14 = ssub.s32 1024, 1024
      %15 = vsyncadd [#allocation4], %s14
      %s16 = sshll.u32 [#allocation3], 4
      %s17 = int_to_ptr.vmem [resolvable:$true] %s16
      %22 = dma.hbm_to_vmem [thread:$0]  %s0, 1024, %s17, [#allocation4], 64, 64, 4
    $region5: #{tpu_custom_call.1} parent=1 // pred_fallthru
      _
    // Predicated region
    $region6: #{tpu_custom_call.1} parent=1 // pred_check
      _
    $region7: #{tpu_custom_call.1} parent=1 // pred_check_branch
      %24 = sbr.rel (0) target = $region9
    $region8: #{tpu_custom_call.1} parent=1 // pred_region
      %s26 = ssub.s32 1024, 1024
      %27 = vsyncadd [#allocation7], %s26
      %s28 = sshll.u32 [#allocation6], 4
      %s29 = int_to_ptr.vmem [resolvable:$true] %s28
      %34 = dma.hbm_to_vmem [thread:$0]  %s1, 1024, %s29, [#allocation7], 64, 64, 4
    $region9: #{tpu_custom_call.1} parent=1 // pred_fallthru
      _
    // Predicated region
    $region10: #{tpu_custom_call.1} parent=1 // pred_check
      _
    $region11: #{tpu_custom_call.1} parent=1 // pred_check_branch
      %36 = sbr.rel (0) target = $region13
    $region12: #{tpu_custom_call.1} parent=1 // pred_region
      %s38 = ssub.s32 16, 16
      %39 = vsyncadd [#allocation7], %s38
      %s41 = sshll.u32 [#allocation8], 4
      %s42 = int_to_ptr.vmem [resolvable:$true] %s41
      %44 = dma.hbm_to_vmem [thread:$0]  %s2, 16, %s42, [#allocation7]
    $region13: #{tpu_custom_call.1} parent=1 // pred_fallthru
      _
    // Predicated region
    $region14: #{tpu_custom_call.1} parent=1 // pred_check
      _
    $region15: #{tpu_custom_call.1} parent=1 // pred_check_branch
      %46 = sbr.rel (0) target = $region17
    $region16: #{tpu_custom_call.1} parent=1 // pred_region
      %47 = dma.done [#allocation4], 1024
    $region17: #{tpu_custom_call.1} parent=1 // pred_fallthru
      _
    // Predicated region
    $region18: #{tpu_custom_call.1} parent=1 // pred_check
      _
    $region19: #{tpu_custom_call.1} parent=1 // pred_check_branch
      %49 = sbr.rel (0) target = $region21
    $region20: #{tpu_custom_call.1} parent=1 // pred_region
      %50 = dma.done [#allocation7], 1024
    $region21: #{tpu_custom_call.1} parent=1 // pred_fallthru
      _
    // Predicated region
    $region22: #{tpu_custom_call.1} parent=1 // pred_check
      _
    $region23: #{tpu_custom_call.1} parent=1 // pred_check_branch
      %52 = sbr.rel (0) target = $region25
    $region24: #{tpu_custom_call.1} parent=1 // pred_region
      %53 = dma.done [#allocation7], 16
    $region25: #{tpu_custom_call.1} parent=1 // pred_fallthru
      _
    %p55 = scmp.eq.s32.totalorder 0, 0
    // Predicated region
    $region26: #{tpu_custom_call.1} parent=1 // pred_check
      %p56 = pneg %p55
    $region27: #{tpu_custom_call.1} parent=1 // pred_check_branch
      %58 = sbr.rel (%p56) target = $region29
    $region28: #{tpu_custom_call.1} parent=1 // pred_region
      %59 = vst [vmem:[#allocation2] sm:$0xff] 0.0
      %60 = vst [vmem:[#allocation2 + $0x8] sm:$0xff] 0.0
      %61 = vst [vmem:[#allocation2 + $0x10] sm:$0xff] 0.0
      %62 = vst [vmem:[#allocation2 + $0x18] sm:$0xff] 0.0
      %63 = vst [vmem:[#allocation2 + $0x20] sm:$0xff] 0.0
      %64 = vst [vmem:[#allocation2 + $0x28] sm:$0xff] 0.0
      %65 = vst [vmem:[#allocation2 + $0x30] sm:$0xff] 0.0
      %66 = vst [vmem:[#allocation2 + $0x38] sm:$0xff] 0.0
      %67 = vst [vmem:[#allocation2 + $0x40] sm:$0xff] 0.0
      %68 = vst [vmem:[#allocation2 + $0x48] sm:$0xff] 0.0
      %69 = vst [vmem:[#allocation2 + $0x50] sm:$0xff] 0.0
      %70 = vst [vmem:[#allocation2 + $0x58] sm:$0xff] 0.0
      %71 = vst [vmem:[#allocation2 + $0x60] sm:$0xff] 0.0
      %72 = vst [vmem:[#allocation2 + $0x68] sm:$0xff] 0.0
      %73 = vst [vmem:[#allocation2 + $0x70] sm:$0xff] 0.0
      %74 = vst [vmem:[#allocation2 + $0x78] sm:$0xff] 0.0
    $region29: #{tpu_custom_call.1} parent=1 // pred_fallthru
      _
    %v75 = vld [vmem:[#allocation2] sm:$0xff]
    %v76 = vld [vmem:[#allocation2 + $0x8] sm:$0xff]
    %v77 = vld [vmem:[#allocation2 + $0x10] sm:$0xff]
    %v78 = vld [vmem:[#allocation2 + $0x18] sm:$0xff]
    %v79 = vld [vmem:[#allocation2 + $0x20] sm:$0xff]
    %v80 = vld [vmem:[#allocation2 + $0x28] sm:$0xff]
    %v81 = vld [vmem:[#allocation2 + $0x30] sm:$0xff]
    %v82 = vld [vmem:[#allocation2 + $0x38] sm:$0xff]
    %v83 = vld [vmem:[#allocation2 + $0x40] sm:$0xff]
    %v84 = vld [vmem:[#allocation2 + $0x48] sm:$0xff]
    %v85 = vld [vmem:[#allocation2 + $0x50] sm:$0xff]
    %v86 = vld [vmem:[#allocation2 + $0x58] sm:$0xff]
    %v87 = vld [vmem:[#allocation2 + $0x60] sm:$0xff]
    %v88 = vld [vmem:[#allocation2 + $0x68] sm:$0xff]
    %v89 = vld [vmem:[#allocation2 + $0x70] sm:$0xff]
    %v90 = vld [vmem:[#allocation2 + $0x78] sm:$0xff]
    %v91 = vld [vmem:[#allocation3] sm:$0xf]
    %v92 = vld [vmem:[#allocation3 + $0x4] sm:$0xf]
    %v93 = vld [vmem:[#allocation3 + $0x8] sm:$0xf]
    %v94 = vld [vmem:[#allocation3 + $0xc] sm:$0xf]
    %v95 = vld [vmem:[#allocation3 + $0x10] sm:$0xf]
    %v96 = vld [vmem:[#allocation3 + $0x14] sm:$0xf]
    %v97 = vld [vmem:[#allocation3 + $0x18] sm:$0xf]
    %v98 = vld [vmem:[#allocation3 + $0x1c] sm:$0xf]
    %v99 = vld [vmem:[#allocation3 + $0x20] sm:$0xf]
    %v100 = vld [vmem:[#allocation3 + $0x24] sm:$0xf]
    %v101 = vld [vmem:[#allocation3 + $0x28] sm:$0xf]
    %v102 = vld [vmem:[#allocation3 + $0x2c] sm:$0xf]
    %v103 = vld [vmem:[#allocation3 + $0x30] sm:$0xf]
    %v104 = vld [vmem:[#allocation3 + $0x34] sm:$0xf]
    %v105 = vld [vmem:[#allocation3 + $0x38] sm:$0xf]
    %v106 = vld [vmem:[#allocation3 + $0x3c] sm:$0xf]
    %v107 = vld [vmem:[#allocation6] sm:$0xf]
    %v108 = vld [vmem:[#allocation6 + $0x4] sm:$0xf]
    %v109 = vld [vmem:[#allocation6 + $0x8] sm:$0xf]
    %v110 = vld [vmem:[#allocation6 + $0xc] sm:$0xf]
    %v111 = vld [vmem:[#allocation6 + $0x10] sm:$0xf]
    %v112 = vld [vmem:[#allocation6 + $0x14] sm:$0xf]
    %v113 = vld [vmem:[#allocation6 + $0x18] sm:$0xf]
    %v114 = vld [vmem:[#allocation6 + $0x1c] sm:$0xf]
    %v115 = vld [vmem:[#allocation6 + $0x20] sm:$0xf]
    %v116 = vld [vmem:[#allocation6 + $0x24] sm:$0xf]
    %v117 = vld [vmem:[#allocation6 + $0x28] sm:$0xf]
    %v118 = vld [vmem:[#allocation6 + $0x2c] sm:$0xf]
    %v119 = vld [vmem:[#allocation6 + $0x30] sm:$0xf]
    %v120 = vld [vmem:[#allocation6 + $0x34] sm:$0xf]
    %v121 = vld [vmem:[#allocation6 + $0x38] sm:$0xf]
    %v122 = vld [vmem:[#allocation6 + $0x3c] sm:$0xf]
    %v139 = vunpack.c.l.b16 %v91
    %v140 = vunpack.c.l.b16 %v92
    %v141 = vunpack.c.l.b16 %v93
    %v142 = vunpack.c.l.b16 %v94
    %v143 = vunpack.c.l.b16 %v95
    %v144 = vunpack.c.l.b16 %v96
    %v145 = vunpack.c.l.b16 %v97
    %v146 = vunpack.c.l.b16 %v98
    %v147 = vunpack.c.l.b16 %v99
    %v148 = vunpack.c.l.b16 %v100
    %v149 = vunpack.c.l.b16 %v101
    %v150 = vunpack.c.l.b16 %v102
    %v151 = vunpack.c.l.b16 %v103
    %v152 = vunpack.c.l.b16 %v104
    %v153 = vunpack.c.l.b16 %v105
    %v154 = vunpack.c.l.b16 %v106
    %v155 = vpack.c.b16 %v140, %v139
    %v156 = vpack.c.b16 %v142, %v141
    %v157 = vpack.c.b16 %v144, %v143
    %v158 = vpack.c.b16 %v146, %v145
    %v159 = vpack.c.b16 %v148, %v147
    %v160 = vpack.c.b16 %v150, %v149
    %v161 = vpack.c.b16 %v152, %v151
    %v162 = vpack.c.b16 %v154, %v153
    %v187 = vunpack.c.l.b16 %v107
    %v188 = vunpack.c.l.b16 %v108
    %v189 = vunpack.c.l.b16 %v109
    %v190 = vunpack.c.l.b16 %v110
    %v191 = vunpack.c.l.b16 %v111
    %v192 = vunpack.c.l.b16 %v112
    %v193 = vunpack.c.l.b16 %v113
    %v194 = vunpack.c.l.b16 %v114
    %v195 = vunpack.c.l.b16 %v115
    %v196 = vunpack.c.l.b16 %v116
    %v197 = vunpack.c.l.b16 %v117
    %v198 = vunpack.c.l.b16 %v118
    %v199 = vunpack.c.l.b16 %v119
    %v200 = vunpack.c.l.b16 %v120
    %v201 = vunpack.c.l.b16 %v121
    %v202 = vunpack.c.l.b16 %v122
    %v203 = vpack.c.b16 %v188, %v187
    %v204 = vpack.c.b16 %v190, %v189
    %v205 = vpack.c.b16 %v192, %v191
    %v206 = vpack.c.b16 %v194, %v193
    %v207 = vpack.c.b16 %v196, %v195
    %v208 = vpack.c.b16 %v198, %v197
    %v209 = vpack.c.b16 %v200, %v199
    %v210 = vpack.c.b16 %v202, %v201
    %219 = vmatprep.subr.bf16.mxu0 0
    %220 = vmatpush1.bf16.msra.mxu0 %v203
    %221 = vmatprep.subr.bf16.mxu0 0
    %222 = vmatpush1.bf16.msra.mxu0 %v204
    %223 = vmatprep.subr.bf16.mxu0 0
    %224 = vmatpush1.bf16.msra.mxu0 %v205
    %225 = vmatprep.subr.bf16.mxu0 0
    %226 = vmatpush1.bf16.msra.mxu0 %v206
    %227 = vmatprep.subr.bf16.mxu0 0
    %228 = vmatpush1.bf16.msra.mxu0 %v207
    %229 = vmatprep.subr.bf16.mxu0 0
    %230 = vmatpush1.bf16.msra.mxu0 %v208
    %231 = vmatprep.subr.bf16.mxu0 0
    %232 = vmatpush1.bf16.msra.mxu0 %v209
    %233 = vmatprep.subr.bf16.mxu0 0
    %234 = vmatpush1.bf16.msra.mxu0 %v210
    %235 = vmatprep.subr.bf16.mxu0 0
    %236 = vmatpush1.bf16.msra.mxu0 0
    %237 = vmatprep.subr.bf16.mxu0 0
    %238 = vmatpush1.bf16.msra.mxu0 0
    %239 = vmatprep.subr.bf16.mxu0 0
    %240 = vmatpush1.bf16.msra.mxu0 0
    %241 = vmatprep.subr.bf16.mxu0 0
    %242 = vmatpush1.bf16.msra.mxu0 0
    %243 = vmatprep.subr.bf16.mxu0 0
    %244 = vmatpush1.bf16.msra.mxu0 0
    %245 = vmatprep.subr.bf16.mxu0 0
    %246 = vmatpush1.bf16.msra.mxu0 0
    %247 = vmatprep.subr.bf16.mxu0 0
    %248 = vmatpush1.bf16.msra.mxu0 0
    %249 = vmatprep.subr.bf16.mxu0 0
    %250 = vmatpush1.bf16.msra.mxu0 0
    %251 = vmatprep.mubr.bf16.mxu0 0
    %252 = vmatmul.mubr.bf16.gmra.mrb[0].mxu0 %v155
    %v253 = vpop.f32.mrb[0].mxu0
    %v254 = vadd.f32 0.0, %v253
    %v255 = vpop.f32.mrb[0].mxu0
    %v256 = vpop.f32.mrb[0].mxu0
    %v257 = vadd.f32 0.0, %v256
    %v258 = vpop.f32.mrb[0].mxu0
    %259 = vmatprep.mubr.bf16.mxu0 0
    %260 = vmatmul.mubr.bf16.gmra.mrb[0].mxu0 %v156
    %v261 = vpop.f32.mrb[0].mxu0
    %v262 = vadd.f32 0.0, %v261
    %v263 = vpop.f32.mrb[0].mxu0
    %v264 = vpop.f32.mrb[0].mxu0
    %v265 = vadd.f32 0.0, %v264
    %v266 = vpop.f32.mrb[0].mxu0
    %267 = vmatprep.mubr.bf16.mxu0 0
    %268 = vmatmul.mubr.bf16.gmra.mrb[0].mxu0 %v157
    %v269 = vpop.f32.mrb[0].mxu0
    %v270 = vadd.f32 0.0, %v269
    %v271 = vpop.f32.mrb[0].mxu0
    %v272 = vpop.f32.mrb[0].mxu0
    %v273 = vadd.f32 0.0, %v272
    %v274 = vpop.f32.mrb[0].mxu0
    %275 = vmatprep.mubr.bf16.mxu0 0
    %276 = vmatmul.mubr.bf16.gmra.mrb[0].mxu0 %v158
    %v277 = vpop.f32.mrb[0].mxu0
    %v278 = vadd.f32 0.0, %v277
    %v279 = vpop.f32.mrb[0].mxu0
    %v280 = vpop.f32.mrb[0].mxu0
    %v281 = vadd.f32 0.0, %v280
    %v282 = vpop.f32.mrb[0].mxu0
    %283 = vmatprep.mubr.bf16.mxu0 0
    %284 = vmatmul.mubr.bf16.gmra.mrb[0].mxu0 %v159
    %v285 = vpop.f32.mrb[0].mxu0
    %v286 = vadd.f32 0.0, %v285
    %v287 = vpop.f32.mrb[0].mxu0
    %v288 = vpop.f32.mrb[0].mxu0
    %v289 = vadd.f32 0.0, %v288
    %v290 = vpop.f32.mrb[0].mxu0
    %291 = vmatprep.mubr.bf16.mxu0 0
    %292 = vmatmul.mubr.bf16.gmra.mrb[0].mxu0 %v160
    %v293 = vpop.f32.mrb[0].mxu0
    %v294 = vadd.f32 0.0, %v293
    %v295 = vpop.f32.mrb[0].mxu0
    %v296 = vpop.f32.mrb[0].mxu0
    %v297 = vadd.f32 0.0, %v296
    %v298 = vpop.f32.mrb[0].mxu0
    %299 = vmatprep.mubr.bf16.mxu0 0
    %300 = vmatmul.mubr.bf16.gmra.mrb[0].mxu0 %v161
    %v301 = vpop.f32.mrb[0].mxu0
    %v302 = vadd.f32 0.0, %v301
    %v303 = vpop.f32.mrb[0].mxu0
    %v304 = vpop.f32.mrb[0].mxu0
    %v305 = vadd.f32 0.0, %v304
    %v306 = vpop.f32.mrb[0].mxu0
    %307 = vmatprep.mubr.bf16.mxu0 0
    %308 = vmatmul.mubr.bf16.gmra.mrb[0].mxu0 %v162
    %v309 = vpop.f32.mrb[0].mxu0
    %v310 = vadd.f32 0.0, %v309
    %v311 = vpop.f32.mrb[0].mxu0
    %v312 = vpop.f32.mrb[0].mxu0
    %v313 = vadd.f32 0.0, %v312
    %v314 = vpop.f32.mrb[0].mxu0
    %315 = vdwg.mxu0
    %v316 = vadd.f32 %v75, %v254
    %v317 = vadd.f32 %v76, %v257
    %v318 = vadd.f32 %v77, %v262
    %v319 = vadd.f32 %v78, %v265
    %v320 = vadd.f32 %v79, %v270
    %v321 = vadd.f32 %v80, %v273
    %v322 = vadd.f32 %v81, %v278
    %v323 = vadd.f32 %v82, %v281
    %v324 = vadd.f32 %v83, %v286
    %v325 = vadd.f32 %v84, %v289
    %v326 = vadd.f32 %v85, %v294
    %v327 = vadd.f32 %v86, %v297
    %v328 = vadd.f32 %v87, %v302
    %v329 = vadd.f32 %v88, %v305
    %v330 = vadd.f32 %v89, %v310
    %v331 = vadd.f32 %v90, %v313
    %332 = vst [vmem:[#allocation2] sm:$0xff] %v316
    %333 = vst [vmem:[#allocation2 + $0x8] sm:$0xff] %v317
    %334 = vst [vmem:[#allocation2 + $0x10] sm:$0xff] %v318
    %335 = vst [vmem:[#allocation2 + $0x18] sm:$0xff] %v319
    %336 = vst [vmem:[#allocation2 + $0x20] sm:$0xff] %v320
    %337 = vst [vmem:[#allocation2 + $0x28] sm:$0xff] %v321
    %338 = vst [vmem:[#allocation2 + $0x30] sm:$0xff] %v322
    %339 = vst [vmem:[#allocation2 + $0x38] sm:$0xff] %v323
    %340 = vst [vmem:[#allocation2 + $0x40] sm:$0xff] %v324
    %341 = vst [vmem:[#allocation2 + $0x48] sm:$0xff] %v325
    %342 = vst [vmem:[#allocation2 + $0x50] sm:$0xff] %v326
    %343 = vst [vmem:[#allocation2 + $0x58] sm:$0xff] %v327
    %344 = vst [vmem:[#allocation2 + $0x60] sm:$0xff] %v328
    %345 = vst [vmem:[#allocation2 + $0x68] sm:$0xff] %v329
    %346 = vst [vmem:[#allocation2 + $0x70] sm:$0xff] %v330
    %347 = vst [vmem:[#allocation2 + $0x78] sm:$0xff] %v331
    // Predicated region
    $region30: #{tpu_custom_call.1} parent=1 // pred_check
      %p348 = pneg %p55
    $region31: #{tpu_custom_call.1} parent=1 // pred_check_branch
      %350 = sbr.rel (%p348) target = $region33
    $region32: #{tpu_custom_call.1} parent=1 // pred_region
      %v351 = vld [vmem:[#allocation2] sm:$0xff]
      %v352 = vld [vmem:[#allocation2 + $0x8] sm:$0xff]
      %v353 = vld [vmem:[#allocation2 + $0x10] sm:$0xff]
      %v354 = vld [vmem:[#allocation2 + $0x18] sm:$0xff]
      %v355 = vld [vmem:[#allocation2 + $0x20] sm:$0xff]
      %v356 = vld [vmem:[#allocation2 + $0x28] sm:$0xff]
      %v357 = vld [vmem:[#allocation2 + $0x30] sm:$0xff]
      %v358 = vld [vmem:[#allocation2 + $0x38] sm:$0xff]
      %v359 = vld [vmem:[#allocation2 + $0x40] sm:$0xff]
      %v360 = vld [vmem:[#allocation2 + $0x48] sm:$0xff]
      %v361 = vld [vmem:[#allocation2 + $0x50] sm:$0xff]
      %v362 = vld [vmem:[#allocation2 + $0x58] sm:$0xff]
      %v363 = vld [vmem:[#allocation2 + $0x60] sm:$0xff]
      %v364 = vld [vmem:[#allocation2 + $0x68] sm:$0xff]
      %v365 = vld [vmem:[#allocation2 + $0x70] sm:$0xff]
      %v366 = vld [vmem:[#allocation2 + $0x78] sm:$0xff]
      %v367 = vld [vmem:[#allocation8] sm:$0x1]
      %v369 = vlaneseq
      %v370 = vshrl.u32 %v369, 7
      %v371 = vsub.s32 0, %v370
      %v372 = vrot.slane %v367, %v371
      %v374 = vadd.f32 %v351, %v372
      %v375 = vadd.f32 %v352, %v372
      %v376 = vadd.f32 %v353, %v372
      %v377 = vadd.f32 %v354, %v372
      %v378 = vadd.f32 %v355, %v372
      %v379 = vadd.f32 %v356, %v372
      %v380 = vadd.f32 %v357, %v372
      %v381 = vadd.f32 %v358, %v372
      %v382 = vadd.f32 %v359, %v372
      %v383 = vadd.f32 %v360, %v372
      %v384 = vadd.f32 %v361, %v372
      %v385 = vadd.f32 %v362, %v372
      %v386 = vadd.f32 %v363, %v372
      %v387 = vadd.f32 %v364, %v372
      %v388 = vadd.f32 %v365, %v372
      %v389 = vadd.f32 %v366, %v372
      %v390 = vxor.u32 %v374, 2147483648
      %v391 = vxor.u32 %v375, 2147483648
      %v392 = vxor.u32 %v376, 2147483648
      %v393 = vxor.u32 %v377, 2147483648
      %v394 = vxor.u32 %v378, 2147483648
      %v395 = vxor.u32 %v379, 2147483648
      %v396 = vxor.u32 %v380, 2147483648
      %v397 = vxor.u32 %v381, 2147483648
      %v398 = vxor.u32 %v382, 2147483648
      %v399 = vxor.u32 %v383, 2147483648
      %v400 = vxor.u32 %v384, 2147483648
      %v401 = vxor.u32 %v385, 2147483648
      %v402 = vxor.u32 %v386, 2147483648
      %v403 = vxor.u32 %v387, 2147483648
      %v404 = vxor.u32 %v388, 2147483648
      %v405 = vxor.u32 %v389, 2147483648
      %v406 = vmul.f32 %v390, 1.442695
      %v407 = vpow.pop %v406
      %v408 = vmul.f32 %v391, 1.442695
      %v409 = vpow.pop %v408
      %v410 = vmul.f32 %v392, 1.442695
      %v411 = vpow.pop %v410
      %v412 = vmul.f32 %v393, 1.442695
      %v413 = vpow.pop %v412
      %v414 = vmul.f32 %v394, 1.442695
      %v415 = vpow.pop %v414
      %v416 = vmul.f32 %v395, 1.442695
      %v417 = vpow.pop %v416
      %v418 = vmul.f32 %v396, 1.442695
      %v419 = vpow.pop %v418
      %v420 = vmul.f32 %v397, 1.442695
      %v421 = vpow.pop %v420
      %v422 = vmul.f32 %v398, 1.442695
      %v423 = vpow.pop %v422
      %v424 = vmul.f32 %v399, 1.442695
      %v425 = vpow.pop %v424
      %v426 = vmul.f32 %v400, 1.442695
      %v427 = vpow.pop %v426
      %v428 = vmul.f32 %v401, 1.442695
      %v429 = vpow.pop %v428
      %v430 = vmul.f32 %v402, 1.442695
      %v431 = vpow.pop %v430
      %v432 = vmul.f32 %v403, 1.442695
      %v433 = vpow.pop %v432
      %v434 = vmul.f32 %v404, 1.442695
      %v435 = vpow.pop %v434
      %v436 = vmul.f32 %v405, 1.442695
      %v437 = vpow.pop %v436
      %v438 = vadd.f32 %v407, 1.0
      %v439 = vadd.f32 %v409, 1.0
      %v440 = vadd.f32 %v411, 1.0
      %v441 = vadd.f32 %v413, 1.0
      %v442 = vadd.f32 %v415, 1.0
      %v443 = vadd.f32 %v417, 1.0
      %v444 = vadd.f32 %v419, 1.0
      %v445 = vadd.f32 %v421, 1.0
      %v446 = vadd.f32 %v423, 1.0
      %v447 = vadd.f32 %v425, 1.0
      %v448 = vadd.f32 %v427, 1.0
      %v449 = vadd.f32 %v429, 1.0
      %v450 = vadd.f32 %v431, 1.0
      %v451 = vadd.f32 %v433, 1.0
      %v452 = vadd.f32 %v435, 1.0
      %v453 = vadd.f32 %v437, 1.0
      %v454 = vrcp.pop %v438
      %v455 = vmul.f32 1.0, %v454
      %v456 = vrcp.pop %v439
      %v457 = vmul.f32 1.0, %v456
      %v458 = vrcp.pop %v440
      %v459 = vmul.f32 1.0, %v458
      %v460 = vrcp.pop %v441
      %v461 = vmul.f32 1.0, %v460
      %v462 = vrcp.pop %v442
      %v463 = vmul.f32 1.0, %v462
      %v464 = vrcp.pop %v443
      %v465 = vmul.f32 1.0, %v464
      %v466 = vrcp.pop %v444
      %v467 = vmul.f32 1.0, %v466
      %v468 = vrcp.pop %v445
      %v469 = vmul.f32 1.0, %v468
      %v470 = vrcp.pop %v446
      %v471 = vmul.f32 1.0, %v470
      %v472 = vrcp.pop %v447
      %v473 = vmul.f32 1.0, %v472
      %v474 = vrcp.pop %v448
      %v475 = vmul.f32 1.0, %v474
      %v476 = vrcp.pop %v449
      %v477 = vmul.f32 1.0, %v476
      %v478 = vrcp.pop %v450
      %v479 = vmul.f32 1.0, %v478
      %v480 = vrcp.pop %v451
      %v481 = vmul.f32 1.0, %v480
      %v482 = vrcp.pop %v452
      %v483 = vmul.f32 1.0, %v482
      %v484 = vrcp.pop %v453
      %v485 = vmul.f32 1.0, %v484
      %486 = vst [vmem:[#allocation9] sm:$0xff] %v455
      %487 = vst [vmem:[#allocation9 + $0x8] sm:$0xff] %v457
      %488 = vst [vmem:[#allocation9 + $0x10] sm:$0xff] %v459
      %489 = vst [vmem:[#allocation9 + $0x18] sm:$0xff] %v461
      %490 = vst [vmem:[#allocation9 + $0x20] sm:$0xff] %v463
      %491 = vst [vmem:[#allocation9 + $0x28] sm:$0xff] %v465
      %492 = vst [vmem:[#allocation9 + $0x30] sm:$0xff] %v467
      %493 = vst [vmem:[#allocation9 + $0x38] sm:$0xff] %v469
      %494 = vst [vmem:[#allocation9 + $0x40] sm:$0xff] %v471
      %495 = vst [vmem:[#allocation9 + $0x48] sm:$0xff] %v473
      %496 = vst [vmem:[#allocation9 + $0x50] sm:$0xff] %v475
      %497 = vst [vmem:[#allocation9 + $0x58] sm:$0xff] %v477
      %498 = vst [vmem:[#allocation9 + $0x60] sm:$0xff] %v479
      %499 = vst [vmem:[#allocation9 + $0x68] sm:$0xff] %v481
      %500 = vst [vmem:[#allocation9 + $0x70] sm:$0xff] %v483
      %501 = vst [vmem:[#allocation9 + $0x78] sm:$0xff] %v485
    $region33: #{tpu_custom_call.1} parent=1 // pred_fallthru
      _
    // Predicated region
    $region34: #{tpu_custom_call.1} parent=1 // pred_check
      _
    $region35: #{tpu_custom_call.1} parent=1 // pred_check_branch
      %503 = sbr.rel (0) target = $region37
    $region36: #{tpu_custom_call.1} parent=1 // pred_region
      %s505 = ssub.s32 2048, 2048
      %506 = vsyncadd [#allocation5], %s505
      %s507 = sshll.u32 [#allocation9], 4
      %s508 = int_to_ptr.vmem [resolvable:$true] %s507
      %513 = dma.vmem_to_hbm [thread:$0]  %s508, 2048, %s3, [#allocation5], 128, 128, 8
    $region37: #{tpu_custom_call.1} parent=1 // pred_fallthru
      _
    // Predicated region
    $region38: #{tpu_custom_call.1} parent=1 // pred_check
      _
    $region39: #{tpu_custom_call.1} parent=1 // pred_check_branch
      %515 = sbr.rel (0) target = $region41
    $region40: #{tpu_custom_call.1} parent=1 // pred_region
      %516 = dma.done [#allocation5], 2048
    $region41: #{tpu_custom_call.1} parent=1 // pred_fallthru
      _
    %517 = vsyncpa [#allocation4], 1
    %518 = vsyncpa [#allocation7], 1
    %519 = vsyncpa [#allocation5], 1

</llo_original>
